<compile_context>
chip_gen: v7x
topology: tpu7x:2x2x1
jax: 0.10.0
libtpu: 0.0.40
codegen_flags: <defaults>
</compile_context>

<pallas_src>
import functools
import math

import jax
import jax.numpy as jnp
from jax.experimental import pallas as pl
from jax.experimental.pallas import tpu as pltpu


def _round_up(n: int, m: int) -> int:
    return ((n + m - 1) // m) * m


def _make_kernel(*, K, pad_l, hp, tL, n_rows, bt, tc, tiled, two_level, S, G, R):
    """Moving-average body over one (bt, tL, tc) tile.

    xe (VMEM scratch) = [left halo (hp rows) | main tile (tL rows) | right halo
    (hp rows)]; replicate padding is written over the halo at the sequence
    edges.  Window sums are taken from shifted slices of xe (two-level when
    K is large)."""
    E = tL + 2 * hp
    off0 = hp - pad_l          # xe row holding x[tile_start - pad_l]
    inv_k = 1.0 / K

    def compute(xl, xm, xr, o_ref, xe_ref, p_ref, is_first, is_last):
        # ---- build the extended tile ------------------------------------
        xe_ref[:, hp:hp + tL, :] = xm[...]
        left_rep = jnp.broadcast_to(xm[:, 0:1, :], (bt, hp, tc))
        right_rep = jnp.broadcast_to(xm[:, tL - 1:tL, :], (bt, hp, tc))

        if xl is None:
            xe_ref[:, 0:hp, :] = left_rep
        else:
            xe_ref[:, 0:hp, :] = xl[...]

            @pl.when(is_first)
            def _():
                xe_ref[:, 0:hp, :] = left_rep

        if xr is None:
            xe_ref[:, hp + tL:E, :] = right_rep
        else:
            xe_ref[:, hp + tL:E, :] = xr[...]

            @pl.when(is_last)
            def _():
                xe_ref[:, hp + tL:E, :] = right_rep

        # ---- window sum ----------------------------------------------------
        if two_level:
            # out[r] = sum_{g<G} P[r + g*S] + sum_{s<R} xe[off0 + r + G*S + s]
            # with P[m] = sum_{s<S} xe[off0 + m + s];  loads/row ~ S + G + R.
            n_p = n_rows + (G - 1) * S
            acc = xe_ref[:, off0:off0 + n_p, :].astype(jnp.float32)
            for s in range(1, S):
                acc = acc + xe_ref[:, off0 + s:off0 + s + n_p, :].astype(jnp.float32)
            p_ref[:, 0:n_p, :] = acc
            out = p_ref[:, 0:n_rows, :]
            for g in range(1, G):
                out = out + p_ref[:, g * S:g * S + n_rows, :]
            for s in range(R):
                lo = off0 + G * S + s
                out = out + xe_ref[:, lo:lo + n_rows, :].astype(jnp.float32)
            o_ref[...] = (out * inv_k).astype(o_ref.dtype)
        else:
            acc = xe_ref[:, off0:off0 + n_rows, :].astype(jnp.float32)
            for k in range(1, K):
                acc = acc + xe_ref[:, off0 + k:off0 + k + n_rows, :].astype(jnp.float32)
            o_ref[...] = (acc * inv_k).astype(o_ref.dtype)

    if tiled:
        if two_level:
            def kernel(xl_ref, xm_ref, xr_ref, o_ref, xe_ref, p_ref):
                t = pl.program_id(2)
                compute(xl_ref, xm_ref, xr_ref, o_ref, xe_ref, p_ref,
                        t == 0, t == pl.num_programs(2) - 1)
        else:
            def kernel(xl_ref, xm_ref, xr_ref, o_ref, xe_ref):
                t = pl.program_id(2)
                compute(xl_ref, xm_ref, xr_ref, o_ref, xe_ref, None,
                        t == 0, t == pl.num_programs(2) - 1)
    else:
        if two_level:
            def kernel(xm_ref, o_ref, xe_ref, p_ref):
                compute(None, xm_ref, None, o_ref, xe_ref, p_ref, None, None)
        else:
            def kernel(xm_ref, o_ref, xe_ref):
                compute(None, xm_ref, None, o_ref, xe_ref, None, None, None)
    return kernel


@functools.partial(jax.jit, static_argnames=("kernel_size", "stride"))
def moving_avg(x, *, kernel_size: int, stride: int = 1):
    """x: (B, L, C) -> (B, L_out, C), matching the PyTorch module exactly."""
    B, L, C = x.shape
    K = int(kernel_size)
    pad_l = (K - 1) // 2
    pad_r = K - 1 - pad_l
    l_out_s1 = L + 2 * pad_l - K + 1           # stride-1 output length
    if l_out_s1 <= 0:
        raise ValueError(f"kernel_size={K} too large for padded length {L + K - 1}")

    itemsize = jnp.dtype(x.dtype).itemsize
    hp = max(8, _round_up(max(pad_l, pad_r), 8))   # halo block rows (sublane-aligned)

    # ---- per-generation VMEM capacity / per-step working-set budget --------
    try:
        cap = int(getattr(pltpu.get_tpu_info(), "vmem_capacity_bytes", 64 << 20))
    except Exception:  # pragma: no cover - conservative default (v7x per-core)
        cap = 64 << 20
    budget = min(max(cap // 3, 16 << 20), 32 << 20)

    # ---- two-level window-sum parameters ------------------------------------
    S = max(2, int(round(math.sqrt(K))))
    G = K // S
    R = K - G * S
    two_level = (K >= 9) and (G >= 2) and (S + G + R) < K

    # ---- lane tile -----------------------------------------------------------
    tc = C if C <= 512 else 512
    nc = pl.cdiv(C, tc)

    def step_bytes(bt_, tL_, tc_, tiled_):
        """Dtype-aware per-grid-step VMEM footprint (sublane packing included)."""
        lanes = _round_up(tc_, 128)

        def buf(rows, isz):
            return bt_ * _round_up(max(rows, 1), 8 * max(1, 4 // isz)) * lanes * isz

        n_rows_ = tL_ if tiled_ else l_out_s1
        total = 2 * buf(tL_, itemsize)                # main input, double buffered
        if tiled_:
            total += 4 * buf(hp, itemsize)            # 2 halo blocks, double buffered
        total += 2 * buf(n_rows_, itemsize)           # output, double buffered
        total += buf(tL_ + 2 * hp, itemsize)          # extended-tile scratch
        if two_level:
            n_p_ = n_rows_ + (G - 1) * S
            total += 2 * buf(n_p_, 4)                 # P scratch + live f32 acc
        else:
            total += buf(n_rows_, 4)                  # live f32 accumulator
        return total

    # ---- time tile: hp | tL, tL | L, tL < L (>= 2 time tiles) ---------------
    cands = [d for d in range(hp, L, hp) if L % d == 0] if (L % hp == 0) else []
    tiled = bool(cands)
    if tiled:
        target = 512
        if B * nc < 4:
            # few batch/lane grid steps -> aim for >= 4 time steps so the
            # pipeline and v7x megacore actually have work to overlap/split.
            target = min(target, max(hp, (L // 4) // hp * hp))
        fit = [d for d in cands if d <= target and step_bytes(1, d, tc, True) <= budget]
        tL = max(fit) if fit else min(cands)
        nt = L // tL
    else:
        tL = L
        nt = 1
        while tc > 128 and step_bytes(1, L, tc, False) > budget:
            tc = max(128, _round_up(tc // 2, 128))
            nc = pl.cdiv(C, tc)
        # TODO(synk): huge L with no hp-multiple divisor would need a ragged
        # time-tiling path; not needed for S4M sequence lengths.

    # ---- batch tile: grow while it fits and the grid keeps enough steps -----
    def total_steps(bt_):
        return pl.cdiv(B, bt_) * nc * nt

    bt = 1
    min_steps = min(4, total_steps(1))
    while (bt * 2 <= B and B % (bt * 2) == 0
           and step_bytes(bt * 2, tL, tc, tiled) <= budget
           and total_steps(bt * 2) >= min_steps):
        bt *= 2

    need = step_bytes(bt, tL, tc, tiled)
    # Never exceed 3/4 of physical VMEM (v7x = 64 MiB) and leave headroom for
    # compiler-internal scratch.
    vmem_limit = int(min(cap * 3 // 4, max(need + (16 << 20), 32 << 20)))

    n_rows = tL if tiled else l_out_s1
    kern = _make_kernel(K=K, pad_l=pad_l, hp=hp, tL=tL, n_rows=n_rows, bt=bt,
                        tc=tc, tiled=tiled, two_level=two_level, S=S, G=G, R=R)

    scratch = [pltpu.VMEM((bt, _round_up(tL + 2 * hp, 8), tc), x.dtype)]
    if two_level:
        n_p = n_rows + (G - 1) * S
        scratch.append(pltpu.VMEM((bt, _round_up(n_p, 8), tc), jnp.float32))

    if tiled:
        r = tL // hp
        n_hblk = L // hp
        in_specs = [
            # left halo: hp rows just before the tile (clamped; overwritten
            # with replicate pad on the first tile)
            pl.BlockSpec((bt, hp, tc),
                         lambda b, c, t: (b, jnp.maximum(t * r - 1, 0), c)),
            # main tile
            pl.BlockSpec((bt, tL, tc), lambda b, c, t: (b, t, c)),
            # right halo: hp rows just after the tile (clamped; overwritten
            # with replicate pad on the last tile)
            pl.BlockSpec((bt, hp, tc),
                         lambda b, c, t: (b, jnp.minimum((t + 1) * r, n_hblk - 1), c)),
        ]
        out_specs = pl.BlockSpec((bt, tL, tc), lambda b, c, t: (b, t, c))
        grid = (pl.cdiv(B, bt), nc, nt)
        dims = ("parallel", "parallel", "parallel")
        args = (x, x, x)
    else:
        in_specs = [pl.BlockSpec((bt, L, tc), lambda b, c: (b, 0, c))]
        out_specs = pl.BlockSpec((bt, l_out_s1, tc), lambda b, c: (b, 0, c))
        grid = (pl.cdiv(B, bt), nc)
        dims = ("parallel", "parallel")
        args = (x,)

    out_full = pl.pallas_call(
        kern,
        out_shape=jax.ShapeDtypeStruct((B, l_out_s1, C), x.dtype),
        grid_spec=pltpu.PrefetchScalarGridSpec(
            num_scalar_prefetch=0,
            grid=grid,
            in_specs=in_specs,
            out_specs=out_specs,
            scratch_shapes=scratch,
        ),
        compiler_params=pltpu.CompilerParams(
            dimension_semantics=dims,
            vmem_limit_bytes=vmem_limit,
        ),
    )(*args)

    if stride != 1:
        # TODO(synk): emit only every stride-th output row in-kernel if
        # stride > 1 ever matters; S4M's series_decomp always uses stride == 1.
        out_full = out_full[:, ::stride, :]
    return out_full


def moving_avg_ref(x, *, kernel_size: int, stride: int = 1):
    """Pure-JAX reference mirroring the PyTorch forward."""
    pad = (kernel_size - 1) // 2
    front = jnp.repeat(x[:, 0:1, :], pad, axis=1)
    end = jnp.repeat(x[:, -1:, :], pad, axis=1)
    xp = jnp.concatenate([front, x, end], axis=1)
    l_pad = xp.shape[1]
    l_out = (l_pad - kernel_size) // stride + 1
    windows = jnp.stack(
        [xp[:, k:k + (l_out - 1) * stride + 1:stride, :] for k in range(kernel_size)],
        axis=0,
    )
    return jnp.mean(windows, axis=0)


if __name__ == "__main__":
    key = jax.random.PRNGKey(0)
    configs = [
        dict(B=2, L=16, C=8, K=5, stride=1),     # time-tiled (tL=8, nt=2), direct taps
        dict(B=2, L=64, C=8, K=25, stride=1),    # S4M-size K: tiled + two-level sum
        dict(B=2, L=16, C=128, K=7, stride=1),   # 128-lane native layout
        dict(B=2, L=16, C=8, K=4, stride=2),     # even K + stride (partial last block)
        dict(B=2, L=30, C=8, K=5, stride=1),     # L not a multiple of 8: single-tile path
    ]
    for i, cfg in enumerate(configs):
        k = jax.random.fold_in(key, i)
        x = jax.random.normal(k, (cfg["B"], cfg["L"], cfg["C"]), dtype=jnp.float32)
        out = moving_avg(x, kernel_size=cfg["K"], stride=cfg["stride"])
        out = jax.block_until_ready(out)
        ref = moving_avg_ref(x, kernel_size=cfg["K"], stride=cfg["stride"])
        assert out.shape == ref.shape, (cfg, out.shape, ref.shape)
        assert jnp.allclose(out, ref, atol=1e-5, rtol=1e-5), ("mismatch", cfg)
    print("KERNEL_OK")
</pallas_src>

<mosaic_0001>
module attributes {stable_mosaic.version = 11 : i64} {
  func.func @kernel(%arg0: i32, %arg1: i32, %arg2: i32, %arg3: memref<1x8x8xf32, #tpu.memory_space<vmem>>, %arg4: memref<1x8x8xf32, #tpu.memory_space<vmem>>, %arg5: memref<1x8x8xf32, #tpu.memory_space<vmem>>, %arg6: memref<1x8x8xf32, #tpu.memory_space<vmem>>, %arg7: memref<1x24x8xf32, #tpu.memory_space<vmem>>) attributes {dimension_semantics = [#tpu.dimension_semantics<parallel>, #tpu.dimension_semantics<parallel>, #tpu.dimension_semantics<parallel>], iteration_bounds = array<i64: 2, 1, 2>, scalar_prefetch = 0 : i64, scratch_operands = 1 : i64, tpu.core_type = #tpu.core_type<tc>, window_params = [{transform_indices = @transform_0, window_bounds = array<i64: 1, 8, 8>}, {transform_indices = @transform_1, window_bounds = array<i64: 1, 8, 8>}, {transform_indices = @transform_2, window_bounds = array<i64: 1, 8, 8>}, {transform_indices = @transform_3, window_bounds = array<i64: 1, 8, 8>}]} {
    %c0_i32 = arith.constant 0 : i32
    %0 = arith.cmpi eq, %arg2, %c0_i32 : i32
    %c1_i32 = arith.constant 1 : i32
    %1 = arith.cmpi eq, %arg2, %c1_i32 : i32
    %c0 = arith.constant 0 : index
    %c0_0 = arith.constant 0 : index
    %c0_1 = arith.constant 0 : index
    %2 = vector.load %arg4[%c0, %c0_0, %c0_1] : memref<1x8x8xf32, #tpu.memory_space<vmem>>, vector<1x8x8xf32>
    %c0_2 = arith.constant 0 : index
    %c8 = arith.constant 8 : index
    %c0_3 = arith.constant 0 : index
    %3 = vector.load %arg7[%c0_2, %c8, %c0_3] : memref<1x24x8xf32, #tpu.memory_space<vmem>>, vector<1x8x8xf32>
    tpu.vector_store %arg7[%c0_2, %c8, %c0_3], %2 {strides = array<i32>} : memref<1x24x8xf32, #tpu.memory_space<vmem>>, vector<1x8x8xf32>,
    %c0_4 = arith.constant 0 : index
    %c0_5 = arith.constant 0 : index
    %c0_6 = arith.constant 0 : index
    %4 = vector.load %arg4[%c0_4, %c0_5, %c0_6] : memref<1x8x8xf32, #tpu.memory_space<vmem>>, vector<1x1x8xf32>
    %5 = vector.shape_cast %4 : vector<1x1x8xf32> to vector<1x1x8xf32>
    %6 = vector.broadcast %5 : vector<1x1x8xf32> to vector<1x8x8xf32>
    %c0_7 = arith.constant 0 : index
    %c7 = arith.constant 7 : index
    %c0_8 = arith.constant 0 : index
    %7 = vector.load %arg4[%c0_7, %c7, %c0_8] : memref<1x8x8xf32, #tpu.memory_space<vmem>>, vector<1x1x8xf32>
    %8 = vector.shape_cast %7 : vector<1x1x8xf32> to vector<1x1x8xf32>
    %9 = vector.broadcast %8 : vector<1x1x8xf32> to vector<1x8x8xf32>
    %c0_9 = arith.constant 0 : index
    %c0_10 = arith.constant 0 : index
    %c0_11 = arith.constant 0 : index
    %10 = vector.load %arg3[%c0_9, %c0_10, %c0_11] : memref<1x8x8xf32, #tpu.memory_space<vmem>>, vector<1x8x8xf32>
    %c0_12 = arith.constant 0 : index
    %c0_13 = arith.constant 0 : index
    %c0_14 = arith.constant 0 : index
    %11 = vector.load %arg7[%c0_12, %c0_13, %c0_14] : memref<1x24x8xf32, #tpu.memory_space<vmem>>, vector<1x8x8xf32>
    tpu.vector_store %arg7[%c0_12, %c0_13, %c0_14], %10 {strides = array<i32>} : memref<1x24x8xf32, #tpu.memory_space<vmem>>, vector<1x8x8xf32>,
    %12 = arith.extui %0 : i1 to i32
    %c0_i32_15 = arith.constant 0 : i32
    %13 = arith.cmpi ne, %12, %c0_i32_15 : i32
    scf.if %13 {
      %c0_37 = arith.constant 0 : index
      %c0_38 = arith.constant 0 : index
      %c0_39 = arith.constant 0 : index
      %30 = vector.load %arg7[%c0_37, %c0_38, %c0_39] : memref<1x24x8xf32, #tpu.memory_space<vmem>>, vector<1x8x8xf32>
      tpu.vector_store %arg7[%c0_37, %c0_38, %c0_39], %6 {strides = array<i32>} : memref<1x24x8xf32, #tpu.memory_space<vmem>>, vector<1x8x8xf32>,
    } else {
    }
    %c0_16 = arith.constant 0 : index
    %c0_17 = arith.constant 0 : index
    %c0_18 = arith.constant 0 : index
    %14 = vector.load %arg5[%c0_16, %c0_17, %c0_18] : memref<1x8x8xf32, #tpu.memory_space<vmem>>, vector<1x8x8xf32>
    %c0_19 = arith.constant 0 : index
    %c16 = arith.constant 16 : index
    %c0_20 = arith.constant 0 : index
    %15 = vector.load %arg7[%c0_19, %c16, %c0_20] : memref<1x24x8xf32, #tpu.memory_space<vmem>>, vector<1x8x8xf32>
    tpu.vector_store %arg7[%c0_19, %c16, %c0_20], %14 {strides = array<i32>} : memref<1x24x8xf32, #tpu.memory_space<vmem>>, vector<1x8x8xf32>,
    %16 = arith.extui %1 : i1 to i32
    %c0_i32_21 = arith.constant 0 : i32
    %17 = arith.cmpi ne, %16, %c0_i32_21 : i32
    scf.if %17 {
      %c0_37 = arith.constant 0 : index
      %c16_38 = arith.constant 16 : index
      %c0_39 = arith.constant 0 : index
      %30 = vector.load %arg7[%c0_37, %c16_38, %c0_39] : memref<1x24x8xf32, #tpu.memory_space<vmem>>, vector<1x8x8xf32>
      tpu.vector_store %arg7[%c0_37, %c16_38, %c0_39], %9 {strides = array<i32>} : memref<1x24x8xf32, #tpu.memory_space<vmem>>, vector<1x8x8xf32>,
    } else {
    }
    %c0_22 = arith.constant 0 : index
    %c6 = arith.constant 6 : index
    %c0_23 = arith.constant 0 : index
    %18 = vector.load %arg7[%c0_22, %c6, %c0_23] : memref<1x24x8xf32, #tpu.memory_space<vmem>>, vector<1x8x8xf32>
    %c0_24 = arith.constant 0 : index
    %c7_25 = arith.constant 7 : index
    %c0_26 = arith.constant 0 : index
    %19 = vector.load %arg7[%c0_24, %c7_25, %c0_26] : memref<1x24x8xf32, #tpu.memory_space<vmem>>, vector<1x8x8xf32>
    %20 = arith.addf %18, %19 : vector<1x8x8xf32>
    %c0_27 = arith.constant 0 : index
    %c8_28 = arith.constant 8 : index
    %c0_29 = arith.constant 0 : index
    %21 = vector.load %arg7[%c0_27, %c8_28, %c0_29] : memref<1x24x8xf32, #tpu.memory_space<vmem>>, vector<1x8x8xf32>
    %22 = arith.addf %20, %21 : vector<1x8x8xf32>
    %c0_30 = arith.constant 0 : index
    %c9 = arith.constant 9 : index
    %c0_31 = arith.constant 0 : index
    %23 = vector.load %arg7[%c0_30, %c9, %c0_31] : memref<1x24x8xf32, #tpu.memory_space<vmem>>, vector<1x8x8xf32>
    %24 = arith.addf %22, %23 : vector<1x8x8xf32>
    %c0_32 = arith.constant 0 : index
    %c10 = arith.constant 10 : index
    %c0_33 = arith.constant 0 : index
    %25 = vector.load %arg7[%c0_32, %c10, %c0_33] : memref<1x24x8xf32, #tpu.memory_space<vmem>>, vector<1x8x8xf32>
    %26 = arith.addf %24, %25 : vector<1x8x8xf32>
    %cst = arith.constant 2.000000e-01 : f32
    %27 = vector.broadcast %cst : f32 to vector<1x8x8xf32>
    %28 = arith.mulf %26, %27 : vector<1x8x8xf32>
    %c0_34 = arith.constant 0 : index
    %c0_35 = arith.constant 0 : index
    %c0_36 = arith.constant 0 : index
    %29 = vector.load %arg6[%c0_34, %c0_35, %c0_36] : memref<1x8x8xf32, #tpu.memory_space<vmem>>, vector<1x8x8xf32>
    tpu.vector_store %arg6[%c0_34, %c0_35, %c0_36], %28 {strides = array<i32>} : memref<1x8x8xf32, #tpu.memory_space<vmem>>, vector<1x8x8xf32>,
    return
  }
  func.func @transform_0(%arg0: i32, %arg1: i32, %arg2: i32) -> (i32, i32, i32) {
    %c1_i32 = arith.constant 1 : i32
    %0 = arith.muli %arg2, %c1_i32 : i32
    %c1_i32_0 = arith.constant 1 : i32
    %1 = arith.subi %0, %c1_i32_0 : i32
    %c0_i32 = arith.constant 0 : i32
    %2 = arith.maxsi %1, %c0_i32 : i32
    %c0_i32_1 = arith.constant 0 : i32
    return %arg0, %2, %arg1 : i32, i32, i32
  }
  func.func @transform_1(%arg0: i32, %arg1: i32, %arg2: i32) -> (i32, i32, i32) {
    %c0_i32 = arith.constant 0 : i32
    return %arg0, %arg2, %arg1 : i32, i32, i32
  }
  func.func @transform_2(%arg0: i32, %arg1: i32, %arg2: i32) -> (i32, i32, i32) {
    %c1_i32 = arith.constant 1 : i32
    %0 = arith.addi %arg2, %c1_i32 : i32
    %c1_i32_0 = arith.constant 1 : i32
    %1 = arith.muli %0, %c1_i32_0 : i32
    %c1_i32_1 = arith.constant 1 : i32
    %2 = arith.minsi %1, %c1_i32_1 : i32
    %c0_i32 = arith.constant 0 : i32
    return %arg0, %2, %arg1 : i32, i32, i32
  }
  func.func @transform_3(%arg0: i32, %arg1: i32, %arg2: i32) -> (i32, i32, i32) {
    %c0_i32 = arith.constant 0 : i32
    return %arg0, %arg2, %arg1 : i32, i32, i32
  }
}

</mosaic_0001>

<llo_original>
// kernel: moving_avg.1
$region0: #{moving_avg.1}
  #allocation0 [shape = 'u32[]', space=smem, size = 0x4, offset = 0x4, fixed_abs, tag = 'smem constant byte address 0x4 - core index']
  #allocation1 [shape = 'u32[144,128]{1,0:T(1,128)}', space=vmem, size = 0x12000, scoped, tag = 'internal scratch']
  #allocation2 [shape = 'f32[1,24,8]{2,1,0:T(8,128)}', space=vmem, size = 0x3000, scoped, tag = 'scratch operand']
  %s0 = inlined_call_operand.vmem [shape: f32[2,16,8], index: 0, kind: input, shape index: {}, may-alias: {0,1,2}]
  %s1 = inlined_call_operand.vmem [shape: f32[2,16,8], index: 1, kind: input, shape index: {}, may-alias: {0,1,2}]
  %s2 = inlined_call_operand.vmem [shape: f32[2,16,8], index: 2, kind: input, shape index: {}, may-alias: {0,1,2}]
  %s3 = inlined_call_operand.vmem [shape: f32[2,16,8], index: 3, kind: output, shape index: {}]
  %s4 = sld [smem:[#allocation0]]
  $region53: #{moving_avg.1} parent=0
    _
  %s6 = ssub.s32 1, %s4
  %s7 = scalar_select 0, %s6, %s4
  loop: start=0, step=1, limit=6
  $region2: #{moving_avg.1} parent=0 // loop_pre_header
    _
  $region3: #{moving_avg.1} parent=0 // loop_header
    %s9 = sphi 0, %s13
    %p10 = scmp.ge.s32.totalorder %s9, 6
    %s16 = sphi 0, %s35
    %s17 = sphi 0, %s31
    %s18 = sphi 0, %s27
    %s19 = sphi 0, %s16
    %s20 = sphi 0, %s17
    %s21 = sphi 0, %s18
    %s22 = sphi 0, %s19
    %s23 = sphi 0, %s20
    %s24 = sphi 0, %s21
    %s48 = sphi 0, %s50
    %s51 = sphi 0, %s48
    %s52 = sphi 0, %s51
    %s68 = sphi 0, %s52
    %s78 = sphi 0, %s80
    %s81 = sphi 0, %s78
    %s82 = sphi 0, %s81
    %s98 = sphi 0, %s82
    %s114 = sphi 0, %s116
    %s117 = sphi 0, %s114
    %s118 = sphi 0, %s117
    %s134 = sphi 0, %s118
    %s144 = sphi 0, %s146
    %s147 = sphi 0, %s144
    %s148 = sphi 0, %s147
    %s164 = sphi 0, %s148
  $region4: #{moving_avg.1} parent=0 // loop_header_branch
    %12 = sbr.rel (%p10) target = $region8
  $region5: #{moving_avg.1} parent=0 // loop_body
    %s14 = ssub.s32 %s9, 1
    %s15 = ssub.s32 %s9, 2
    %s25 = sadd.s32 1, %s18
    %p26 = scmp.ge.s32.totalorder %s25, 2
    %s27 = scalar_select %p26, 0, %s25
    %s28 = sadd.s32 1, %s17
    %s29 = scalar_select %p26, %s28, %s17
    %p30 = scmp.ge.s32.totalorder %s29, 1
    %s31 = scalar_select %p30, 0, %s29
    %s32 = sadd.s32 1, %s16
    %s33 = scalar_select %p30, %s32, %s16
    %p34 = scmp.ge.s32.totalorder %s33, 2
    %s35 = scalar_select %p34, 0, %s33
    %s36 = ssub.s32 %s18, 1
    %p37 = scmp.gt.s32.totalorder %s36, 0
    %s38 = scalar_select %p37, %s36, 0
    %s39 = ssub.s32 %s27, 1
    %p40 = scmp.gt.s32.totalorder %s39, 0
    %s41 = scalar_select %p40, %s39, 0
    %s42 = ssub.s32 %s16, %s35
    %s43 = ssub.s32 %s38, %s41
    %s44 = sor.u32 %s42, %s43
    %s45 = ssub.s32 %s17, %s31
    %s46 = sor.u32 %s44, %s45
    %p47 = scmp.eq.s32.totalorder %s46, 0
    %s49 = sadd.s32 %s48, 1
    %s50 = scalar_select %p47, %s48, %s49
    %p53 = pneg %p47
    %p54 = scmp.eq.s32.totalorder %s9, 3
    %p55 = por %p53, %p54
    %p56 = scmp.ne.s32.totalorder %s48, %s51
    %p57 = scmp.eq.s32.totalorder %s9, 0
    %p58 = por %p56, %p57
    %p59 = scmp.ne.s32.totalorder %s48, %s51
    %p60 = scmp.eq.s32.totalorder %s14, 3
    %p61 = por %p59, %p60
    %p62 = scmp.ne.s32.totalorder %s51, %s52
    %p63 = scmp.eq.s32.totalorder %s14, 0
    %p64 = por %p62, %p63
    %p65 = scmp.ne.s32.totalorder %s51, %s52
    %p66 = scmp.eq.s32.totalorder %s15, 3
    %p67 = por %p65, %p66
    %p69 = scmp.ne.s32.totalorder %s52, %s68
    %p70 = scmp.eq.s32.totalorder %s15, 0
    %p71 = por %p69, %p70
    %s72 = ssub.s32 %s16, %s35
    %s73 = ssub.s32 %s18, %s27
    %s74 = sor.u32 %s72, %s73
    %s75 = ssub.s32 %s17, %s31
    %s76 = sor.u32 %s74, %s75
    %p77 = scmp.eq.s32.totalorder %s76, 0
    %s79 = sadd.s32 %s78, 1
    %s80 = scalar_select %p77, %s78, %s79
    %p83 = pneg %p77
    %p84 = scmp.eq.s32.totalorder %s9, 3
    %p85 = por %p83, %p84
    %p86 = scmp.ne.s32.totalorder %s78, %s81
    %p87 = scmp.eq.s32.totalorder %s9, 0
    %p88 = por %p86, %p87
    %p89 = scmp.ne.s32.totalorder %s78, %s81
    %p90 = scmp.eq.s32.totalorder %s14, 3
    %p91 = por %p89, %p90
    %p92 = scmp.ne.s32.totalorder %s81, %s82
    %p93 = scmp.eq.s32.totalorder %s14, 0
    %p94 = por %p92, %p93
    %p95 = scmp.ne.s32.totalorder %s81, %s82
    %p96 = scmp.eq.s32.totalorder %s15, 3
    %p97 = por %p95, %p96
    %p99 = scmp.ne.s32.totalorder %s82, %s98
    %p100 = scmp.eq.s32.totalorder %s15, 0
    %p101 = por %p99, %p100
    %s102 = sadd.s32 %s18, 1
    %p103 = scmp.lt.s32.totalorder %s102, 1
    %s104 = scalar_select %p103, %s102, 1
    %s105 = sadd.s32 %s27, 1
    %p106 = scmp.lt.s32.totalorder %s105, 1
    %s107 = scalar_select %p106, %s105, 1
    %s108 = ssub.s32 %s16, %s35
    %s109 = ssub.s32 %s104, %s107
    %s110 = sor.u32 %s108, %s109
    %s111 = ssub.s32 %s17, %s31
    %s112 = sor.u32 %s110, %s111
    %p113 = scmp.eq.s32.totalorder %s112, 0
    %s115 = sadd.s32 %s114, 1
    %s116 = scalar_select %p113, %s114, %s115
    %p119 = pneg %p113
    %p120 = scmp.eq.s32.totalorder %s9, 3
    %p121 = por %p119, %p120
    %p122 = scmp.ne.s32.totalorder %s114, %s117
    %p123 = scmp.eq.s32.totalorder %s9, 0
    %p124 = por %p122, %p123
    %p125 = scmp.ne.s32.totalorder %s114, %s117
    %p126 = scmp.eq.s32.totalorder %s14, 3
    %p127 = por %p125, %p126
    %p128 = scmp.ne.s32.totalorder %s117, %s118
    %p129 = scmp.eq.s32.totalorder %s14, 0
    %p130 = por %p128, %p129
    %p131 = scmp.ne.s32.totalorder %s117, %s118
    %p132 = scmp.eq.s32.totalorder %s15, 3
    %p133 = por %p131, %p132
    %p135 = scmp.ne.s32.totalorder %s118, %s134
    %p136 = scmp.eq.s32.totalorder %s15, 0
    %p137 = por %p135, %p136
    %s138 = ssub.s32 %s16, %s35
    %s139 = ssub.s32 %s18, %s27
    %s140 = sor.u32 %s138, %s139
    %s141 = ssub.s32 %s17, %s31
    %s142 = sor.u32 %s140, %s141
    %p143 = scmp.eq.s32.totalorder %s142, 0
    %s145 = sadd.s32 %s144, 1
    %s146 = scalar_select %p143, %s144, %s145
    %p149 = pneg %p143
    %p150 = scmp.eq.s32.totalorder %s9, 3
    %p151 = por %p149, %p150
    %p152 = scmp.ne.s32.totalorder %s144, %s147
    %p153 = scmp.eq.s32.totalorder %s9, 0
    %p154 = por %p152, %p153
    %p155 = scmp.ne.s32.totalorder %s144, %s147
    %p156 = scmp.eq.s32.totalorder %s14, 3
    %p157 = por %p155, %p156
    %p158 = scmp.ne.s32.totalorder %s147, %s148
    %p159 = scmp.eq.s32.totalorder %s14, 0
    %p160 = por %p158, %p159
    %p161 = scmp.ne.s32.totalorder %s147, %s148
    %p162 = scmp.eq.s32.totalorder %s15, 3
    %p163 = por %p161, %p162
    %p165 = scmp.ne.s32.totalorder %s148, %s164
    %p166 = scmp.eq.s32.totalorder %s15, 0
    %p167 = por %p165, %p166
    %p168 = scmp.le.s32.totalorder 1, %s9
    %p169 = scmp.lt.s32.totalorder %s9, 5
    %p170 = pnand %p168, %p169
    %p171 = pneg %p170
    // Predicated region
    $region9: #{moving_avg.1} parent=5 // pred_check
      _
    $region10: #{moving_avg.1} parent=5 // pred_check_branch
      %173 = sbr.rel (%p170) target = $region12
    $region11: #{moving_avg.1} parent=5 // pred_region
      %s174 = ssub.s32 %s9, 1
    $region12: #{moving_avg.1} parent=5 // pred_fallthru
      _
    %p175 = scmp.lt.s32.totalorder %s9, 4
    // Predicated region
    $region13: #{moving_avg.1} parent=5 // pred_check
      %p176 = pneg %p175
    $region14: #{moving_avg.1} parent=5 // pred_check_branch
      %178 = sbr.rel (%p176) target = $region16
    $region15: #{moving_avg.1} parent=5 // pred_region
      // Predicated region
      $region17: #{moving_avg.1} parent=15 // pred_check
        %p179 = pneg %p58
      $region18: #{moving_avg.1} parent=15 // pred_check_branch
        %181 = sbr.rel (%p179) target = $region20
      $region19: #{moving_avg.1} parent=15 // pred_region
        %s182 = ssub.s32 %s18, 1
        %p183 = scmp.gt.s32.totalorder %s182, 0
        %s184 = scalar_select %p183, %s182, 0
        %p185 = scmp.lt.s32.totalorder %s16, 1
        %s186 = scalar_select %p185, %s16, 1
        %p187 = scmp.lt.s32.totalorder %s184, 1
        %s188 = scalar_select %p187, %s184, 1
        %p189 = scmp.lt.s32.totalorder %s17, 0
        %s190 = scalar_select %p189, %s17, 0
        %s191 = sadd.s32 %s190, %s188
        %s192 = smul.addr %s186, 2
        %s193 = sadd.s32 %s191, %s192
        %s194 = smul.addr %s193, 8
        %s195 = scalar_lea.vmem %s0, %s194
        %s196 = ssub.s32 %s18, 1
        %p197 = scmp.gt.s32.totalorder %s196, 0
        %s198 = scalar_select %p197, %s196, 0
      $region20: #{moving_avg.1} parent=15 // pred_fallthru
        _
      // Predicated region
      $region21: #{moving_avg.1} parent=15 // pred_check
        %p199 = pneg %p88
      $region22: #{moving_avg.1} parent=15 // pred_check_branch
        %201 = sbr.rel (%p199) target = $region24
      $region23: #{moving_avg.1} parent=15 // pred_region
        %p202 = scmp.lt.s32.totalorder %s16, 1
        %s203 = scalar_select %p202, %s16, 1
        %p204 = scmp.lt.s32.totalorder %s18, 1
        %s205 = scalar_select %p204, %s18, 1
        %p206 = scmp.lt.s32.totalorder %s17, 0
        %s207 = scalar_select %p206, %s17, 0
        %s208 = sadd.s32 %s207, %s205
        %s209 = smul.addr %s203, 2
        %s210 = sadd.s32 %s208, %s209
        %s211 = smul.addr %s210, 8
        %s212 = scalar_lea.vmem %s1, %s211
      $region24: #{moving_avg.1} parent=15 // pred_fallthru
        _
      // Predicated region
      $region25: #{moving_avg.1} parent=15 // pred_check
        %p213 = pneg %p124
      $region26: #{moving_avg.1} parent=15 // pred_check_branch
        %215 = sbr.rel (%p213) target = $region28
      $region27: #{moving_avg.1} parent=15 // pred_region
        %s216 = sadd.s32 %s18, 1
        %p217 = scmp.lt.s32.totalorder %s216, 1
        %s218 = scalar_select %p217, %s216, 1
        %p219 = scmp.lt.s32.totalorder %s16, 1
        %s220 = scalar_select %p219, %s16, 1
        %p221 = scmp.lt.s32.totalorder %s218, 1
        %s222 = scalar_select %p221, %s218, 1
        %p223 = scmp.lt.s32.totalorder %s17, 0
        %s224 = scalar_select %p223, %s17, 0
        %s225 = sadd.s32 %s224, %s222
        %s226 = smul.addr %s220, 2
        %s227 = sadd.s32 %s225, %s226
        %s228 = smul.addr %s227, 8
        %s229 = scalar_lea.vmem %s2, %s228
        %s230 = sadd.s32 %s18, 1
        %p231 = scmp.lt.s32.totalorder %s230, 1
        %s232 = scalar_select %p231, %s230, 1
      $region28: #{moving_avg.1} parent=15 // pred_fallthru
        _
    $region16: #{moving_avg.1} parent=5 // pred_fallthru
      _
    %p233 = scmp.le.s32.totalorder 1, %s9
    %p234 = scmp.lt.s32.totalorder %s9, 5
    %p235 = pnand %p233, %p234
    %p236 = pneg %p235
    // Predicated region
    $region29: #{moving_avg.1} parent=5 // pred_check
      _
    $region30: #{moving_avg.1} parent=5 // pred_check_branch
      %238 = sbr.rel (%p235) target = $region32
    $region31: #{moving_avg.1} parent=5 // pred_region
      %s239 = ssub.s32 %s9, 1
      %s240 = ssub.s32 %s21, 1
      %p241 = scmp.gt.s32.totalorder %s240, 0
      %s242 = scalar_select %p241, %s240, 0
      %p243 = scmp.lt.s32.totalorder %s19, 1
      %s244 = scalar_select %p243, %s19, 1
      %p245 = scmp.lt.s32.totalorder %s242, 1
      %s246 = scalar_select %p245, %s242, 1
      %p247 = scmp.lt.s32.totalorder %s20, 0
      %s248 = scalar_select %p247, %s20, 0
      %s249 = sadd.s32 %s248, %s246
      %s250 = smul.addr %s244, 2
      %s251 = sadd.s32 %s249, %s250
      %s252 = smul.addr %s251, 8
      %s253 = scalar_lea.vmem %s0, %s252
      %p254 = pneg %p64
      %p255 = pneg %p61
      %p256 = scmp.lt.s32.totalorder %s19, 1
      %s257 = scalar_select %p256, %s19, 1
      %p258 = scmp.lt.s32.totalorder %s21, 1
      %s259 = scalar_select %p258, %s21, 1
      %p260 = scmp.lt.s32.totalorder %s20, 0
      %s261 = scalar_select %p260, %s20, 0
      %s262 = sadd.s32 %s261, %s259
      %s263 = smul.addr %s257, 2
      %s264 = sadd.s32 %s262, %s263
      %s265 = smul.addr %s264, 8
      %s266 = scalar_lea.vmem %s1, %s265
      %p267 = pneg %p94
      %p268 = pneg %p91
      %s269 = sadd.s32 %s21, 1
      %p270 = scmp.lt.s32.totalorder %s269, 1
      %s271 = scalar_select %p270, %s269, 1
      %p272 = scmp.lt.s32.totalorder %s19, 1
      %s273 = scalar_select %p272, %s19, 1
      %p274 = scmp.lt.s32.totalorder %s271, 1
      %s275 = scalar_select %p274, %s271, 1
      %p276 = scmp.lt.s32.totalorder %s20, 0
      %s277 = scalar_select %p276, %s20, 0
      %s278 = sadd.s32 %s277, %s275
      %s279 = smul.addr %s273, 2
      %s280 = sadd.s32 %s278, %s279
      %s281 = smul.addr %s280, 8
      %s282 = scalar_lea.vmem %s2, %s281
      %p283 = pneg %p130
      %p284 = pneg %p127
      %p285 = pneg %p160
      %p286 = pneg %p157
      %p287 = scmp.lt.s32.totalorder %s19, 1
      %s288 = scalar_select %p287, %s19, 1
      %p289 = scmp.lt.s32.totalorder %s21, 1
      %s290 = scalar_select %p289, %s21, 1
      %p291 = scmp.lt.s32.totalorder %s20, 0
      %s292 = scalar_select %p291, %s20, 0
      %s293 = sadd.s32 %s292, %s290
      %s294 = smul.addr %s288, 2
      %s295 = sadd.s32 %s293, %s294
      %s296 = smul.addr %s295, 8
      %s297 = scalar_lea.vmem %s3, %s296
      %s298 = ssub.s32 %s21, 1
      %p299 = scmp.gt.s32.totalorder %s298, 0
      %s300 = scalar_select %p299, %s298, 0
      %p301 = scmp.lt.s32.totalorder %s19, 1
      %s302 = scalar_select %p301, %s19, 1
      %p303 = scmp.lt.s32.totalorder %s300, 1
      %s304 = scalar_select %p303, %s300, 1
      %p305 = scmp.lt.s32.totalorder %s20, 0
      %s306 = scalar_select %p305, %s20, 0
      %s307 = sadd.s32 %s306, %s304
      %s308 = smul.addr %s302, 2
      %s309 = sadd.s32 %s307, %s308
      %s310 = smul.addr %s309, 8
      %s311 = scalar_lea.vmem %s0, %s310
      %s312 = ssub.s32 %s21, 1
      %p313 = scmp.gt.s32.totalorder %s312, 0
      %s314 = scalar_select %p313, %s312, 0
      %p315 = scmp.lt.s32.totalorder %s19, 1
      %s316 = scalar_select %p315, %s19, 1
      %p317 = scmp.lt.s32.totalorder %s21, 1
      %s318 = scalar_select %p317, %s21, 1
      %p319 = scmp.lt.s32.totalorder %s20, 0
      %s320 = scalar_select %p319, %s20, 0
      %s321 = sadd.s32 %s320, %s318
      %s322 = smul.addr %s316, 2
      %s323 = sadd.s32 %s321, %s322
      %s324 = smul.addr %s323, 8
      %s325 = scalar_lea.vmem %s1, %s324
      %s326 = sadd.s32 %s21, 1
      %p327 = scmp.lt.s32.totalorder %s326, 1
      %s328 = scalar_select %p327, %s326, 1
      %p329 = scmp.lt.s32.totalorder %s19, 1
      %s330 = scalar_select %p329, %s19, 1
      %p331 = scmp.lt.s32.totalorder %s328, 1
      %s332 = scalar_select %p331, %s328, 1
      %p333 = scmp.lt.s32.totalorder %s20, 0
      %s334 = scalar_select %p333, %s20, 0
      %s335 = sadd.s32 %s334, %s332
      %s336 = smul.addr %s330, 2
      %s337 = sadd.s32 %s335, %s336
      %s338 = smul.addr %s337, 8
      %s339 = scalar_lea.vmem %s2, %s338
      %s340 = sadd.s32 %s21, 1
      %p341 = scmp.lt.s32.totalorder %s340, 1
      %s342 = scalar_select %p341, %s340, 1
      %p343 = scmp.lt.s32.totalorder %s19, 1
      %s344 = scalar_select %p343, %s19, 1
      %p345 = scmp.lt.s32.totalorder %s21, 1
      %s346 = scalar_select %p345, %s21, 1
      %p347 = scmp.lt.s32.totalorder %s20, 0
      %s348 = scalar_select %p347, %s20, 0
      %s349 = sadd.s32 %s348, %s346
      %s350 = smul.addr %s344, 2
      %s351 = sadd.s32 %s349, %s350
      %s352 = smul.addr %s351, 8
      %s353 = scalar_lea.vmem %s3, %s352
      %p354 = scmp.eq.s32.totalorder %s21, 0
      %p355 = scmp.eq.s32.totalorder %s21, 1
      %v356 = vld [vmem:[%s325] sm:$0xff]
      %vm357 = vcmask 64512
      %358 = vst.msk [vmem:[#allocation2 + $0x8] sm:$0xff] %vm357, %v356
      %v359 = vld [vmem:[%s325] sm:$0x1]
      %v360 = vlaneseq
      %v361 = vshrl.u32 %v360, 7
      %v362 = vsub.s32 0, %v361
      %v363 = vrot.slane %v359, %v362
      %v364 = vld [vmem:[%s325 + $0x7] sm:$0x1]
      %v365 = vlaneseq
      %v366 = vshrl.u32 %v365, 7
      %v367 = vsub.s32 0, %v366
      %v368 = vrot.slane %v364, %v367
      %v369 = vld [vmem:[%s311] sm:$0xff]
      %370 = vst.msk [vmem:[#allocation2] sm:$0xff] %vm357, %v369
      // Predicated region
      $region33: #{moving_avg.1} parent=31 // pred_check
        %p371 = pneg %p354
      $region34: #{moving_avg.1} parent=31 // pred_check_branch
        %373 = sbr.rel (%p371) target = $region36
      $region35: #{moving_avg.1} parent=31 // pred_region
        %374 = vst.msk [vmem:[#allocation2] sm:$0xff] %vm357, %v363
      $region36: #{moving_avg.1} parent=31 // pred_fallthru
        _
      %v375 = vld [vmem:[%s339] sm:$0xff]
      %376 = vst.msk [vmem:[#allocation2 + $0x10] sm:$0xff] %vm357, %v375
      // Predicated region
      $region37: #{moving_avg.1} parent=31 // pred_check
        %p377 = pneg %p355
      $region38: #{moving_avg.1} parent=31 // pred_check_branch
        %379 = sbr.rel (%p377) target = $region40
      $region39: #{moving_avg.1} parent=31 // pred_region
        %380 = vst.msk [vmem:[#allocation2 + $0x10] sm:$0xff] %vm357, %v368
      $region40: #{moving_avg.1} parent=31 // pred_fallthru
        _
      %v381 = vld [vmem:[#allocation2 + $0x6] sm:$0xff]
      %v382 = vld [vmem:[#allocation2 + $0x7] sm:$0xff]
      %v383 = vadd.f32 %v381, %v382
      %v384 = vld [vmem:[#allocation2 + $0x8] sm:$0xff]
      %v385 = vadd.f32 %v383, %v384
      %v386 = vld [vmem:[#allocation2 + $0x9] sm:$0xff]
      %v387 = vadd.f32 %v385, %v386
      %v388 = vld [vmem:[#allocation2 + $0xa] sm:$0xff]
      %v389 = vadd.f32 %v387, %v388
      %v390 = vmul.f32 %v389, 0.2
      %391 = vst.msk [vmem:[%s353] sm:$0xff] %vm357, %v390
      %p392 = scmp.lt.s32.totalorder %s19, 1
      %s393 = scalar_select %p392, %s19, 1
      %p394 = scmp.lt.s32.totalorder %s21, 1
      %s395 = scalar_select %p394, %s21, 1
      %p396 = scmp.lt.s32.totalorder %s20, 0
      %s397 = scalar_select %p396, %s20, 0
      %s398 = sadd.s32 %s397, %s395
      %s399 = smul.addr %s393, 2
      %s400 = sadd.s32 %s398, %s399
      %s401 = smul.addr %s400, 8
      %s402 = scalar_lea.vmem %s3, %s401
      // Predicated region
      $region41: #{moving_avg.1} parent=31 // pred_check
        %p403 = pneg %p157
      $region42: #{moving_avg.1} parent=31 // pred_check_branch
        %405 = sbr.rel (%p403) target = $region44
      $region43: #{moving_avg.1} parent=31 // pred_region
        _
      $region44: #{moving_avg.1} parent=31 // pred_fallthru
        _
    $region32: #{moving_avg.1} parent=5 // pred_fallthru
      _
    %p406 = scmp.le.s32.totalorder 2, %s9
    // Predicated region
    $region45: #{moving_avg.1} parent=5 // pred_check
      %p407 = pneg %p406
    $region46: #{moving_avg.1} parent=5 // pred_check_branch
      %409 = sbr.rel (%p407) target = $region48
    $region47: #{moving_avg.1} parent=5 // pred_region
      %s410 = ssub.s32 %s9, 2
      // Predicated region
      $region49: #{moving_avg.1} parent=47 // pred_check
        %p411 = pneg %p163
      $region50: #{moving_avg.1} parent=47 // pred_check_branch
        %413 = sbr.rel (%p411) target = $region52
      $region51: #{moving_avg.1} parent=47 // pred_region
        %p414 = scmp.lt.s32.totalorder %s22, 1
        %s415 = scalar_select %p414, %s22, 1
        %p416 = scmp.lt.s32.totalorder %s24, 1
        %s417 = scalar_select %p416, %s24, 1
        %p418 = scmp.lt.s32.totalorder %s23, 0
        %s419 = scalar_select %p418, %s23, 0
        %s420 = sadd.s32 %s419, %s417
        %s421 = smul.addr %s415, 2
        %s422 = sadd.s32 %s420, %s421
        %s423 = smul.addr %s422, 8
        %s424 = scalar_lea.vmem %s3, %s423
      $region52: #{moving_avg.1} parent=47 // pred_fallthru
        _
    $region48: #{moving_avg.1} parent=5 // pred_fallthru
      _
  $region6: #{moving_avg.1} parent=0 // loop_footer
    %s13 = sadd.s32 1, %s9
  $region7: #{moving_avg.1} parent=0 // loop_footer_branch
    %8 = sbr.rel target = $region3
  $region8: #{moving_avg.1} parent=0 // loop_exit
    _

</llo_original>
